<compile_context>
chip_gen: v7x
topology: tpu7x:2x2x1
jax: 0.10.0
libtpu: 0.0.40
codegen_flags: <defaults>
</compile_context>

<pallas_src>
import functools
import math

import jax
import jax.numpy as jnp
from jax import lax
from jax.experimental import pallas as pl
from jax.experimental.pallas import tpu as pltpu


NEG_LOG_1E4 = float(-math.log(1e-4))  # -log(1e-4) = 9.2103403...


def sce_kernel(pred_ref, labels_ref, out_ref, *, alpha, beta):
    x = pred_ref[...].astype(jnp.float32)          # (tm, C) logits
    tm, C = x.shape
    lbl = labels_ref[...]                          # (tm, 1) int32, per-tile DMA

    # --- stable softmax pieces (single exp over the tile) --------------------
    x_max = jnp.max(x, axis=1, keepdims=True)
    shifted = x - x_max                            # (tm, C)
    e = jnp.exp(shifted)                           # (tm, C), reused below
    sum_e = jnp.sum(e, axis=1, keepdims=True)      # (tm, 1)
    inv_sum_e = pl.reciprocal(sum_e, approx=False)
    log_sum_e = jnp.log(sum_e)                     # (tm, 1)

    # --- label mask: (1, C) iota broadcast against (tm, 1) labels ------------
    class_ids = lax.broadcasted_iota(jnp.int32, (1, C), 1)
    mask = class_ids == lbl                        # (tm, C) bool

    # shifted value at the label column (one select + one row-reduction).
    shifted_label = jnp.sum(jnp.where(mask, shifted, 0.0), axis=1,
                            keepdims=True)         # (tm, 1)

    # --- CE: -log_softmax at the label column, without materializing logp ----
    ce_row = log_sum_e - shifted_label             # (tm, 1)

    # --- RCE: -log(1e-4) * (sum(p_clipped) - p_label_clipped) ----------------
    p = jnp.clip(e * inv_sum_e, 1e-7, 1.0 - 1e-7)  # clipped softmax (for sum)
    p_sum = jnp.sum(p, axis=1, keepdims=True)      # (tm, 1)
    p_lab = jnp.clip(jnp.exp(shifted_label) * inv_sum_e, 1e-7, 1.0 - 1e-7)
    rce_row = NEG_LOG_1E4 * (p_sum - p_lab)        # (tm, 1)

    partial = alpha * jnp.sum(ce_row) + beta * jnp.sum(rce_row)

    # Write this tile's partial into element (0,0) of its own (8,128) block.
    r = lax.broadcasted_iota(jnp.int32, out_ref.shape, 0)
    c = lax.broadcasted_iota(jnp.int32, out_ref.shape, 1)
    out_ref[...] = jnp.where((r == 0) & (c == 0), partial, 0.0)


def _vmem_policy():
    """Generation-aware (per-buffer budget, scoped VMEM limit) in bytes."""
    vmem_cap = 128 * 1024 * 1024
    try:
        vmem_cap = int(pltpu.get_tpu_info().vmem_capacity_bytes)
    except Exception:
        pass
    if vmem_cap <= 64 * 1024 * 1024:
        # v7x-class: 64 MiB physical VMEM -> leave headroom for labels tile,
        # double-buffering and internal scratch.
        return 12 * 1024 * 1024, 48 * 1024 * 1024
    # v5e / v6e: 128 MiB physical VMEM -> use it.
    return 24 * 1024 * 1024, 96 * 1024 * 1024


def _choose_tm(N, C, per_buf_bytes):
    """Largest legal batch tile (multiple-of-8 divisor of N) within the
    per-buffer VMEM budget, preferring >= 2 tiles so the parallel grid axis
    can be sharded across both TensorCores on v7x."""
    c_pad = ((C + 127) // 128) * 128               # lane-padded width in VMEM
    cap = max(8, per_buf_bytes // (c_pad * 4))

    candidates = []
    d = 1
    while d * d <= N:
        if N % d == 0:
            for t in (d, N // d):
                if t % 8 == 0 and t <= cap:
                    candidates.append(t)
        d += 1

    multi = [t for t in candidates if N // t >= 2]
    if multi:
        return max(multi)                          # big tile AND >= 2 tiles
    if candidates:
        return max(candidates)
    # No legal multiple-of-8 divisor fits -> full batch as a single tile.
    # TODO(synk): tail-row masking (pl.cdiv grid) for awkward batch sizes.
    return N


def symmetric_cross_entropy(pred, labels, num_classes, alpha, beta, *, tm=None):
    """alpha * CrossEntropy(pred, labels) + beta * ReverseCE(pred, labels)."""
    N, C = pred.shape
    assert C == num_classes

    per_buf_bytes, vmem_limit = _vmem_policy()
    if tm is None:
        tm = _choose_tm(N, C, per_buf_bytes)
    assert N % tm == 0, "batch must be a multiple of the tile size"
    assert tm % 8 == 0 or tm == N, "tile sublane dim must be /8 or full batch"
    num_tiles = N // tm

    labels2d = labels.reshape(N, 1).astype(jnp.int32)
    kernel = functools.partial(sce_kernel, alpha=float(alpha), beta=float(beta))

    partials = pl.pallas_call(
        kernel,
        out_shape=jax.ShapeDtypeStruct((num_tiles * 8, 128), jnp.float32),
        grid_spec=pltpu.PrefetchScalarGridSpec(
            num_scalar_prefetch=0,
            grid=(num_tiles,),
            in_specs=[
                # pred: one (tm, C) tile per grid step (big, efficient DMA).
                pl.BlockSpec((tm, C), lambda i: (i, 0)),
                # labels: matching (tm, 1) tile, pipelined with pred.
                pl.BlockSpec((tm, 1), lambda i: (i, 0)),
            ],
            # Each tile writes its own lane-dense (8,128) block of partials.
            out_specs=pl.BlockSpec((8, 128), lambda i: (i, 0)),
        ),
        compiler_params=pltpu.CompilerParams(
            dimension_semantics=("parallel",),      # both TCs on v7x
            vmem_limit_bytes=vmem_limit,
        ),
    )(pred, labels2d)

    # Tiny final reduction outside the kernel (only (0,0) of each block is set).
    return jnp.sum(partials) / N


def reference_sce(pred, labels, num_classes, alpha, beta):
    """Plain-JAX reference matching the PyTorch SymmetricCrossEntropy forward."""
    x = pred.astype(jnp.float32)
    logp = jax.nn.log_softmax(x, axis=1)
    ce = jnp.mean(-jnp.take_along_axis(logp, labels[:, None].astype(jnp.int32),
                                       axis=1)[:, 0])
    prob = jnp.clip(jax.nn.softmax(x, axis=1), 1e-7, 1.0 - 1e-7)
    oh = jnp.clip(jax.nn.one_hot(labels, num_classes, dtype=jnp.float32),
                  1e-4, 1.0)
    rce = jnp.mean(-jnp.sum(prob * jnp.log(oh), axis=1))
    return alpha * ce + beta * rce


if __name__ == "__main__":
    # Loss-module hyperparameters (deterministic, set in-script).
    num_classes = 10
    alpha = 1.0
    beta = 0.1

    # Small deterministic inputs: batch=32, classes=10 logits.
    key = jax.random.PRNGKey(0)
    k_pred, k_lbl = jax.random.split(key)
    pred = jax.random.normal(k_pred, (32, num_classes), dtype=jnp.float32)
    labels = jax.random.randint(k_lbl, (32,), 0, num_classes, dtype=jnp.int32)

    ref = reference_sce(pred, labels, num_classes, alpha, beta)

    # 1) Auto tile size (chooser splits into >= 2 tiles for megacore).
    loss = symmetric_cross_entropy(pred, labels, num_classes, alpha, beta)
    loss = jax.block_until_ready(loss)
    assert jnp.allclose(loss, ref, rtol=1e-5, atol=1e-5), (loss, ref)

    # 2) Forced small tile to exercise a longer multi-tile parallel grid.
    loss_tiled = symmetric_cross_entropy(pred, labels, num_classes, alpha, beta,
                                         tm=8)
    loss_tiled = jax.block_until_ready(loss_tiled)
    assert jnp.allclose(loss_tiled, ref, rtol=1e-5, atol=1e-5), (loss_tiled, ref)

    print("KERNEL_OK")
</pallas_src>

<mosaic_0001>
module attributes {stable_mosaic.version = 11 : i64} {
  func.func @sce_kernel(%arg0: i32, %arg1: memref<16x10xf32, #tpu.memory_space<vmem>>, %arg2: memref<16x1xi32, #tpu.memory_space<vmem>>, %arg3: memref<8x128xf32, #tpu.memory_space<vmem>>) attributes {dimension_semantics = [#tpu.dimension_semantics<parallel>], iteration_bounds = array<i64: 2>, scalar_prefetch = 0 : i64, scratch_operands = 0 : i64, tpu.core_type = #tpu.core_type<tc>, window_params = [{transform_indices = @transform_0, window_bounds = array<i64: 16, 10>}, {transform_indices = @transform_1, window_bounds = array<i64: 16, 1>}, {transform_indices = @transform_2, window_bounds = array<i64: 8, 128>}]} {
    %c0 = arith.constant 0 : index
    %c0_0 = arith.constant 0 : index
    %0 = vector.load %arg1[%c0, %c0_0] : memref<16x10xf32, #tpu.memory_space<vmem>>, vector<16x10xf32>
    %c0_1 = arith.constant 0 : index
    %c0_2 = arith.constant 0 : index
    %1 = vector.load %arg2[%c0_1, %c0_2] : memref<16x1xi32, #tpu.memory_space<vmem>>, vector<16x1xi32>
    %cst = arith.constant dense<0xFF800000> : vector<16xf32>
    %2 = vector.multi_reduction <maximumf>, %0, %cst [1] : vector<16x10xf32> to vector<16xf32>
    %3 = vector.shape_cast %2 : vector<16xf32> to vector<16x1xf32>
    %4 = vector.broadcast %3 : vector<16x1xf32> to vector<16x10xf32>
    %5 = arith.subf %0, %4 : vector<16x10xf32>
    %6 = math.exp %5 : vector<16x10xf32>
    %cst_3 = arith.constant dense<0.000000e+00> : vector<16xf32>
    %7 = vector.multi_reduction <add>, %6, %cst_3 [1] : vector<16x10xf32> to vector<16xf32>
    %8 = vector.shape_cast %7 : vector<16xf32> to vector<16x1xf32>
    %9 = tpu.reciprocal %8 : vector<16x1xf32> -> vector<16x1xf32>
    %10 = math.log %8 : vector<16x1xf32>
    %11 = tpu.iota {dimensions = array<i32: 1>} : vector<1x10xi32>
    %12 = vector.broadcast %11 : vector<1x10xi32> to vector<16x10xi32>
    %13 = vector.broadcast %1 : vector<16x1xi32> to vector<16x10xi32>
    %14 = arith.cmpi eq, %12, %13 : vector<16x10xi32>
    %cst_4 = arith.constant 0.000000e+00 : f32
    %15 = vector.broadcast %cst_4 : f32 to vector<16x10xf32>
    %16 = arith.select %14, %5, %15 : vector<16x10xi1>, vector<16x10xf32>
    %cst_5 = arith.constant dense<0.000000e+00> : vector<16xf32>
    %17 = vector.multi_reduction <add>, %16, %cst_5 [1] : vector<16x10xf32> to vector<16xf32>
    %18 = vector.shape_cast %17 : vector<16xf32> to vector<16x1xf32>
    %19 = arith.subf %10, %18 : vector<16x1xf32>
    %20 = vector.broadcast %9 : vector<16x1xf32> to vector<16x10xf32>
    %21 = arith.mulf %6, %20 : vector<16x10xf32>
    %cst_6 = arith.constant 1.000000e-07 : f32
    %cst_7 = arith.constant 0.99999988 : f32
    %22 = vector.broadcast %cst_6 : f32 to vector<16x10xf32>
    %23 = arith.maximumf %22, %21 : vector<16x10xf32>
    %24 = vector.broadcast %cst_7 : f32 to vector<16x10xf32>
    %25 = arith.minimumf %24, %23 : vector<16x10xf32>
    %cst_8 = arith.constant dense<0.000000e+00> : vector<16xf32>
    %26 = vector.multi_reduction <add>, %25, %cst_8 [1] : vector<16x10xf32> to vector<16xf32>
    %27 = vector.shape_cast %26 : vector<16xf32> to vector<16x1xf32>
    %28 = math.exp %18 : vector<16x1xf32>
    %29 = arith.mulf %28, %9 : vector<16x1xf32>
    %cst_9 = arith.constant 1.000000e-07 : f32
    %cst_10 = arith.constant 0.99999988 : f32
    %30 = vector.broadcast %cst_9 : f32 to vector<16x1xf32>
    %31 = arith.maximumf %30, %29 : vector<16x1xf32>
    %32 = vector.broadcast %cst_10 : f32 to vector<16x1xf32>
    %33 = arith.minimumf %32, %31 : vector<16x1xf32>
    %34 = arith.subf %27, %33 : vector<16x1xf32>
    %cst_11 = arith.constant 9.21034049 : f32
    %35 = vector.broadcast %cst_11 : f32 to vector<16x1xf32>
    %36 = arith.mulf %35, %34 : vector<16x1xf32>
    %37 = vector.shape_cast %19 : vector<16x1xf32> to vector<1x16x1xf32>
    %cst_12 = arith.constant dense<0.000000e+00> : vector<1xf32>
    %38 = vector.multi_reduction <add>, %37, %cst_12 [1, 2] : vector<1x16x1xf32> to vector<1xf32>
    %39 = vector.shape_cast %38 : vector<1xf32> to vector<1x1x1xf32>
    %40 = vector.extract %39[0, 0, 0] : f32 from vector<1x1x1xf32>
    %cst_13 = arith.constant 1.000000e+00 : f32
    %41 = arith.mulf %cst_13, %40 : f32
    %42 = vector.shape_cast %36 : vector<16x1xf32> to vector<1x16x1xf32>
    %cst_14 = arith.constant dense<0.000000e+00> : vector<1xf32>
    %43 = vector.multi_reduction <add>, %42, %cst_14 [1, 2] : vector<1x16x1xf32> to vector<1xf32>
    %44 = vector.shape_cast %43 : vector<1xf32> to vector<1x1x1xf32>
    %45 = vector.extract %44[0, 0, 0] : f32 from vector<1x1x1xf32>
    %cst_15 = arith.constant 1.000000e-01 : f32
    %46 = arith.mulf %cst_15, %45 : f32
    %47 = arith.addf %41, %46 : f32
    %48 = tpu.iota {dimensions = array<i32: 0>} : vector<8x128xi32>
    %49 = tpu.iota {dimensions = array<i32: 1>} : vector<8x128xi32>
    %c0_i32 = arith.constant 0 : i32
    %50 = vector.broadcast %c0_i32 : i32 to vector<8x128xi32>
    %51 = arith.cmpi eq, %48, %50 : vector<8x128xi32>
    %c0_i32_16 = arith.constant 0 : i32
    %52 = vector.broadcast %c0_i32_16 : i32 to vector<8x128xi32>
    %53 = arith.cmpi eq, %49, %52 : vector<8x128xi32>
    %54 = arith.andi %51, %53 : vector<8x128xi1>
    %cst_17 = arith.constant 0.000000e+00 : f32
    %55 = vector.broadcast %47 : f32 to vector<8x128xf32>
    %56 = vector.broadcast %cst_17 : f32 to vector<8x128xf32>
    %57 = arith.select %54, %55, %56 : vector<8x128xi1>, vector<8x128xf32>
    %c0_18 = arith.constant 0 : index
    %c0_19 = arith.constant 0 : index
    %58 = vector.load %arg3[%c0_18, %c0_19] : memref<8x128xf32, #tpu.memory_space<vmem>>, vector<8x128xf32>
    tpu.vector_store %arg3[%c0_18, %c0_19], %57 {strides = array<i32>} : memref<8x128xf32, #tpu.memory_space<vmem>>, vector<8x128xf32>,
    return
  }
  func.func @transform_0(%arg0: i32) -> (i32, i32) {
    %c0_i32 = arith.constant 0 : i32
    %c0_i32_0 = arith.constant 0 : i32
    return %arg0, %c0_i32 : i32, i32
  }
  func.func @transform_1(%arg0: i32) -> (i32, i32) {
    %c0_i32 = arith.constant 0 : i32
    %c0_i32_0 = arith.constant 0 : i32
    return %arg0, %c0_i32 : i32, i32
  }
  func.func @transform_2(%arg0: i32) -> (i32, i32) {
    %c0_i32 = arith.constant 0 : i32
    %c0_i32_0 = arith.constant 0 : i32
    return %arg0, %c0_i32 : i32, i32
  }
}

</mosaic_0001>

<llo_original>
// kernel: tpu_custom_call.1
$region0: #{tpu_custom_call.1}
  #allocation0 [shape = 'u32[]', space=smem, size = 0x4, offset = 0x4, fixed_abs, tag = 'smem constant byte address 0x4 - core index']
  #allocation1 [shape = 'u32[144,128]{1,0:T(1,128)}', space=vmem, size = 0x12000, scoped, tag = 'internal scratch']
  %s0 = inlined_call_operand.hbm [shape: f32[32,10], index: 0, kind: input, shape index: {}]
  %s1 = inlined_call_operand.hbm [shape: s32[32,1], index: 1, kind: input, shape index: {}]
  %s2 = inlined_call_operand.hbm [shape: f32[16,128], index: 2, kind: output, shape index: {}]
  %s3 = sld [smem:[#allocation0]]
  $region49: #{tpu_custom_call.1} parent=0
    _
  %s5 = ssub.s32 1, %s3
  %s6 = scalar_select 0, %s5, %s3
  $region1: #{tpu_custom_call.1} parent=0
    #allocation2 [shape = 'u8[16384]{0}', space=vmem, size = 0x4000, scoped, tag = 'input window, operand 0']
    #allocation3 [shape = 's32[2]{0}', space=sflag, size = 0x8, scoped, tag = 'scoped memory for tpu_custom_call.1']
    #allocation4 [shape = 's32[2]{0}', space=sflag, size = 0x8, scoped, tag = 'scoped memory for tpu_custom_call.1']
    #allocation5 [shape = 'u8[16384]{0}', space=vmem, size = 0x4000, scoped, tag = 'input window, operand 1']
    #allocation6 [shape = 's32[2]{0}', space=sflag, size = 0x8, scoped, tag = 'scoped memory for tpu_custom_call.1']
    #allocation7 [shape = 'u8[8192]{0}', space=vmem, size = 0x2000, scoped, tag = 'output window, operand 0']
    %7 = vsyncpa [#allocation3], 0
    %s8 = scalar_lea.sflag [#allocation3], 1
    %9 = vsyncpa %s8, 0
    %10 = vsyncpa [#allocation6], 0
    %s11 = scalar_lea.sflag [#allocation6], 1
    %12 = vsyncpa %s11, 0
    %13 = vsyncpa [#allocation4], 0
    %s14 = scalar_lea.sflag [#allocation4], 1
    %15 = vsyncpa %s14, 0
    loop: start=0, step=1, limit=4
    $region2: #{tpu_custom_call.1} parent=1 // loop_pre_header
      _
    $region3: #{tpu_custom_call.1} parent=1 // loop_header
      %s17 = sphi 0, %s21
      %p18 = scmp.ge.s32.totalorder %s17, 4
      %s27 = sphi 0, %s29
      %s30 = sphi 0, %s27
      %s31 = sphi 0, %s30
      %s47 = sphi 0, %s31
      %s53 = sphi 0, %s55
      %s56 = sphi 0, %s53
      %s57 = sphi 0, %s56
      %s73 = sphi 0, %s57
      %s79 = sphi 0, %s81
      %s82 = sphi 0, %s79
      %s83 = sphi 0, %s82
      %s99 = sphi 0, %s83
    $region4: #{tpu_custom_call.1} parent=1 // loop_header_branch
      %20 = sbr.rel (%p18) target = $region8
    $region5: #{tpu_custom_call.1} parent=1 // loop_body
      %s22 = ssub.s32 %s17, 1
      %s23 = ssub.s32 %s17, 2
      %s24 = sadd.s32 %s17, 1
      %s25 = ssub.s32 %s17, %s24
      %p26 = scmp.eq.s32.totalorder %s25, 0
      %s28 = sadd.s32 %s27, 1
      %s29 = scalar_select %p26, %s27, %s28
      %p32 = pneg %p26
      %p33 = scmp.eq.s32.totalorder %s17, 1
      %p34 = por %p32, %p33
      %p35 = scmp.ne.s32.totalorder %s27, %s30
      %p36 = scmp.eq.s32.totalorder %s17, 0
      %p37 = por %p35, %p36
      %p38 = scmp.ne.s32.totalorder %s27, %s30
      %p39 = scmp.eq.s32.totalorder %s22, 1
      %p40 = por %p38, %p39
      %p41 = scmp.ne.s32.totalorder %s30, %s31
      %p42 = scmp.eq.s32.totalorder %s22, 0
      %p43 = por %p41, %p42
      %p44 = scmp.ne.s32.totalorder %s30, %s31
      %p45 = scmp.eq.s32.totalorder %s23, 1
      %p46 = por %p44, %p45
      %p48 = scmp.ne.s32.totalorder %s31, %s47
      %p49 = scmp.eq.s32.totalorder %s23, 0
      %p50 = por %p48, %p49
      %s51 = ssub.s32 %s17, %s24
      %p52 = scmp.eq.s32.totalorder %s51, 0
      %s54 = sadd.s32 %s53, 1
      %s55 = scalar_select %p52, %s53, %s54
      %p58 = pneg %p52
      %p59 = scmp.eq.s32.totalorder %s17, 1
      %p60 = por %p58, %p59
      %p61 = scmp.ne.s32.totalorder %s53, %s56
      %p62 = scmp.eq.s32.totalorder %s17, 0
      %p63 = por %p61, %p62
      %p64 = scmp.ne.s32.totalorder %s53, %s56
      %p65 = scmp.eq.s32.totalorder %s22, 1
      %p66 = por %p64, %p65
      %p67 = scmp.ne.s32.totalorder %s56, %s57
      %p68 = scmp.eq.s32.totalorder %s22, 0
      %p69 = por %p67, %p68
      %p70 = scmp.ne.s32.totalorder %s56, %s57
      %p71 = scmp.eq.s32.totalorder %s23, 1
      %p72 = por %p70, %p71
      %p74 = scmp.ne.s32.totalorder %s57, %s73
      %p75 = scmp.eq.s32.totalorder %s23, 0
      %p76 = por %p74, %p75
      %s77 = ssub.s32 %s17, %s24
      %p78 = scmp.eq.s32.totalorder %s77, 0
      %s80 = sadd.s32 %s79, 1
      %s81 = scalar_select %p78, %s79, %s80
      %p84 = pneg %p78
      %p85 = scmp.eq.s32.totalorder %s17, 1
      %p86 = por %p84, %p85
      %p87 = scmp.ne.s32.totalorder %s79, %s82
      %p88 = scmp.eq.s32.totalorder %s17, 0
      %p89 = por %p87, %p88
      %p90 = scmp.ne.s32.totalorder %s79, %s82
      %p91 = scmp.eq.s32.totalorder %s22, 1
      %p92 = por %p90, %p91
      %p93 = scmp.ne.s32.totalorder %s82, %s83
      %p94 = scmp.eq.s32.totalorder %s22, 0
      %p95 = por %p93, %p94
      %p96 = scmp.ne.s32.totalorder %s82, %s83
      %p97 = scmp.eq.s32.totalorder %s23, 1
      %p98 = por %p96, %p97
      %p100 = scmp.ne.s32.totalorder %s83, %s99
      %p101 = scmp.eq.s32.totalorder %s23, 0
      %p102 = por %p100, %p101
      %p103 = scmp.le.s32.totalorder 1, %s17
      %p104 = scmp.lt.s32.totalorder %s17, 3
      %p105 = pnand %p103, %p104
      %p106 = pneg %p105
      // Predicated region
      $region9: #{tpu_custom_call.1} parent=5 // pred_check
        _
      $region10: #{tpu_custom_call.1} parent=5 // pred_check_branch
        %108 = sbr.rel (%p105) target = $region12
      $region11: #{tpu_custom_call.1} parent=5 // pred_region
        %s109 = ssub.s32 %s17, 1
      $region12: #{tpu_custom_call.1} parent=5 // pred_fallthru
        _
      %p110 = scmp.lt.s32.totalorder %s17, 2
      // Predicated region
      $region13: #{tpu_custom_call.1} parent=5 // pred_check
        %p111 = pneg %p110
      $region14: #{tpu_custom_call.1} parent=5 // pred_check_branch
        %113 = sbr.rel (%p111) target = $region16
      $region15: #{tpu_custom_call.1} parent=5 // pred_region
        // Predicated region
        $region17: #{tpu_custom_call.1} parent=15 // pred_check
          %p114 = pneg %p37
        $region18: #{tpu_custom_call.1} parent=15 // pred_check_branch
          %116 = sbr.rel (%p114) target = $region20
        $region19: #{tpu_custom_call.1} parent=15 // pred_region
          %s117 = sand.u32 %s27, 1
          %s118 = scalar_lea.sflag [#allocation3], %s117
          %s119 = sand.u32 %s27, 1
          %s120 = smul.addr %s119, 16
          %s121 = scalar_lea.vmem [#allocation2], %s120
          %s122 = smul.u32 2, %s17
          %s124 = ssub.s32 256, 256
          %125 = vsyncadd %s118, %s124
          %s126 = smul.addr %s122, 128
          %s127 = scalar_lea.hbm %s0, %s126
          %s128 = sshll.u32 %s121, 4
          %s129 = int_to_ptr.vmem [resolvable:$true] %s128
          %134 = dma.hbm_to_vmem [thread:$0]  %s127, 256, %s129, %s118, 128, 128, 8
        $region20: #{tpu_custom_call.1} parent=15 // pred_fallthru
          _
        // Predicated region
        $region21: #{tpu_custom_call.1} parent=15 // pred_check
          %p135 = pneg %p63
        $region22: #{tpu_custom_call.1} parent=15 // pred_check_branch
          %137 = sbr.rel (%p135) target = $region24
        $region23: #{tpu_custom_call.1} parent=15 // pred_region
          %s138 = sand.u32 %s53, 1
          %s139 = scalar_lea.sflag [#allocation6], %s138
          %s140 = sand.u32 %s53, 1
          %s141 = smul.addr %s140, 16
          %s142 = scalar_lea.vmem [#allocation5], %s141
          %s143 = smul.u32 2, %s17
          %s145 = ssub.s32 256, 256
          %146 = vsyncadd %s139, %s145
          %s147 = smul.addr %s143, 128
          %s148 = scalar_lea.hbm %s1, %s147
          %s149 = sshll.u32 %s142, 4
          %s150 = int_to_ptr.vmem [resolvable:$true] %s149
          %155 = dma.hbm_to_vmem [thread:$0]  %s148, 256, %s150, %s139, 128, 128, 8
        $region24: #{tpu_custom_call.1} parent=15 // pred_fallthru
          _
      $region16: #{tpu_custom_call.1} parent=5 // pred_fallthru
        _
      %p156 = scmp.le.s32.totalorder 1, %s17
      %p157 = scmp.lt.s32.totalorder %s17, 3
      %p158 = pnand %p156, %p157
      %p159 = pneg %p158
      // Predicated region
      $region25: #{tpu_custom_call.1} parent=5 // pred_check
        _
      $region26: #{tpu_custom_call.1} parent=5 // pred_check_branch
        %161 = sbr.rel (%p158) target = $region28
      $region27: #{tpu_custom_call.1} parent=5 // pred_region
        %s162 = ssub.s32 %s17, 1
        %s163 = sand.u32 %s30, 1
        %s164 = scalar_lea.sflag [#allocation3], %s163
        %s165 = sand.u32 %s30, 1
        %s166 = smul.addr %s165, 16
        %s167 = scalar_lea.vmem [#allocation2], %s166
        // Predicated region
        $region29: #{tpu_custom_call.1} parent=27 // pred_check
          %p168 = pneg %p43
        $region30: #{tpu_custom_call.1} parent=27 // pred_check_branch
          %170 = sbr.rel (%p168) target = $region32
        $region31: #{tpu_custom_call.1} parent=27 // pred_region
          %171 = dma.done %s164, 256
        $region32: #{tpu_custom_call.1} parent=27 // pred_fallthru
          _
        %s172 = sand.u32 %s56, 1
        %s173 = scalar_lea.sflag [#allocation6], %s172
        %s174 = sand.u32 %s56, 1
        %s175 = smul.addr %s174, 16
        %s176 = scalar_lea.vmem [#allocation5], %s175
        // Predicated region
        $region33: #{tpu_custom_call.1} parent=27 // pred_check
          %p177 = pneg %p69
        $region34: #{tpu_custom_call.1} parent=27 // pred_check_branch
          %179 = sbr.rel (%p177) target = $region36
        $region35: #{tpu_custom_call.1} parent=27 // pred_region
          %180 = dma.done %s173, 256
        $region36: #{tpu_custom_call.1} parent=27 // pred_fallthru
          _
        %s181 = sand.u32 %s30, 1
        %s182 = scalar_lea.sflag [#allocation3], %s181
        %s183 = sand.u32 %s30, 1
        %s184 = smul.addr %s183, 16
        %s185 = scalar_lea.vmem [#allocation2], %s184
        %p186 = pneg %p43
        %p187 = pneg %p40
        %s188 = sand.u32 %s56, 1
        %s189 = scalar_lea.sflag [#allocation6], %s188
        %s190 = sand.u32 %s56, 1
        %s191 = smul.addr %s190, 16
        %s192 = scalar_lea.vmem [#allocation5], %s191
        %p193 = pneg %p69
        %p194 = pneg %p66
        %p195 = pneg %p95
        %p196 = pneg %p92
        %s197 = sand.u32 %s82, 1
        %s198 = scalar_lea.sflag [#allocation4], %s197
        %s199 = sand.u32 %s82, 1
        %s200 = smul.addr %s199, 8
        %s201 = scalar_lea.vmem [#allocation7], %s200
        %s202 = smul.u32 2, %s22
        %s203 = smul.u32 2, %s22
        %v204 = vld [vmem:[%s167] sm:$0xff]
        %v205 = vld [vmem:[%s167 + $0x8] sm:$0xff]
        %v206 = vld [vmem:[%s176] sm:$0xff]
        %v207 = vld [vmem:[%s176 + $0x8] sm:$0xff]
        %vm208 = vcmask 80896
        %v209 = vsel %vm208, %v204, -inf
        %210 = vmax.xlane.f32.xlu0 %v209
        %v211 = vpop.xlane.xlu0 %210
        %v212 = vsel %vm208, %v205, -inf
        %213 = vmax.xlane.f32.xlu0 %v212
        %v214 = vpop.xlane.xlu0 %213
        %v215 = vsub.f32 %v204, %v211
        %v216 = vsub.f32 %v205, %v214
        %v217 = vmul.f32 %v215, 1.442695
        %v218 = vpow.pop %v217
        %v219 = vmul.f32 %v216, 1.442695
        %v220 = vpow.pop %v219
        %v221 = vsel %vm208, %v218, 0.0
        %222 = vadd.xlane.f32.xlu0 %v221
        %v223 = vpop.xlane.xlu0 %222
        %v224 = vsel %vm208, %v220, 0.0
        %225 = vadd.xlane.f32.xlu0 %v224
        %v226 = vpop.xlane.xlu0 %225
        %v227 = vrcp.pop %v223
        %v228 = vrcp.pop %v226
        %v229 = vlog2.pop %v223
        %v230 = vmul.f32 %v229, 0.6931472
        %v231 = vlog2.pop %v226
        %v232 = vmul.f32 %v231, 0.6931472
        %v233 = vlaneseq
        %v234 = vand.u32 %v233, 127
        %235 = vset.pattern.permute.xlu0 0
        %236 = vperm.xlu0 %235, %v206
        %v237 = vpop.permute.xlu0 %236
        %238 = vset.pattern.permute.xlu0 0
        %239 = vperm.xlu0 %238, %v207
        %v240 = vpop.permute.xlu0 %239
        %vm241 = vcmp.eq.s32.totalorder %v234, %v237
        %vm242 = vcmp.eq.s32.totalorder %v234, %v240
        %v243 = vsel %vm241, %v215, 0.0
        %v244 = vsel %vm242, %v216, 0.0
        %v245 = vsel %vm208, %v243, 0.0
        %246 = vadd.xlane.f32.xlu0 %v245
        %v247 = vpop.xlane.xlu0 %246
        %v248 = vsel %vm208, %v244, 0.0
        %249 = vadd.xlane.f32.xlu0 %v248
        %v250 = vpop.xlane.xlu0 %249
        %v251 = vsub.f32 %v230, %v247
        %v252 = vsub.f32 %v232, %v250
        %v253 = vmul.f32 %v218, %v227
        %v254 = vmul.f32 %v220, %v228
        %v255 = vmax.f32 %v253, 1e-07
        %v256 = vmax.f32 %v254, 1e-07
        %v257 = vmin.f32 %v255, 0.9999999
        %v258 = vmin.f32 %v256, 0.9999999
        %v259 = vsel %vm208, %v257, 0.0
        %260 = vadd.xlane.f32.xlu0 %v259
        %v261 = vpop.xlane.xlu0 %260
        %v262 = vsel %vm208, %v258, 0.0
        %263 = vadd.xlane.f32.xlu0 %v262
        %v264 = vpop.xlane.xlu0 %263
        %v265 = vmul.f32 %v247, 1.442695
        %v266 = vpow.pop %v265
        %v267 = vmul.f32 %v250, 1.442695
        %v268 = vpow.pop %v267
        %v269 = vmul.f32 %v266, %v227
        %v270 = vmul.f32 %v268, %v228
        %v271 = vmax.f32 %v269, 1e-07
        %v272 = vmax.f32 %v270, 1e-07
        %v273 = vmin.f32 %v271, 0.9999999
        %v274 = vmin.f32 %v272, 0.9999999
        %v275 = vsub.f32 %v261, %v273
        %v276 = vsub.f32 %v264, %v274
        %v277 = vmul.f32 %v275, 9.2103405
        %v278 = vmul.f32 %v276, 9.2103405
        %vm279 = vcmask 7168
        %v280 = vsel %vm279, %v251, 0.0
        %v281 = vsel %vm279, %v252, 0.0
        %v282 = vadd.f32 %v280, %v281
        %283 = vadd.xlane.f32.xlu0 %v282
        %v284 = vpop.xlane.xlu0 %283
        %v285 = vrot.slane %v284, 4
        %v286 = vadd.f32 %v284, %v285
        %v287 = vrot.slane %v286, 2
        %v288 = vadd.f32 %v286, %v287
        %v289 = vrot.slane %v288, 1
        %v290 = vadd.f32 %v288, %v289
        %s291 = vtos %v290
        %v292 = vsel %vm279, %v277, 0.0
        %v293 = vsel %vm279, %v278, 0.0
        %v294 = vadd.f32 %v292, %v293
        %295 = vadd.xlane.f32.xlu0 %v294
        %v296 = vpop.xlane.xlu0 %295
        %v297 = vrot.slane %v296, 4
        %v298 = vadd.f32 %v296, %v297
        %v299 = vrot.slane %v298, 2
        %v300 = vadd.f32 %v298, %v299
        %v301 = vrot.slane %v300, 1
        %v302 = vadd.f32 %v300, %v301
        %s303 = vtos %v302
        %s304 = smul.f32 %s303, 0.1
        %s305 = sadd.f32 %s291, %s304
        %v306 = vlaneseq
        %v307 = vshrl.u32 %v306, 7
        %vm308 = vcmp.eq.s32.totalorder %v307, 0
        %vm309 = vcmp.eq.s32.totalorder %v234, 0
        %vm310 = vmand %vm308, %vm309
        %v311 = vstv %s305
        %v312 = vsel %vm310, %v311, 0.0
        %313 = vst [vmem:[%s201] sm:$0xff] %v312
        %s314 = sand.u32 %s82, 1
        %s315 = scalar_lea.sflag [#allocation4], %s314
        %s316 = sand.u32 %s82, 1
        %s317 = smul.addr %s316, 8
        %s318 = scalar_lea.vmem [#allocation7], %s317
        // Predicated region
        $region37: #{tpu_custom_call.1} parent=27 // pred_check
          %p319 = pneg %p92
        $region38: #{tpu_custom_call.1} parent=27 // pred_check_branch
          %321 = sbr.rel (%p319) target = $region40
        $region39: #{tpu_custom_call.1} parent=27 // pred_region
          %s323 = ssub.s32 128, 128
          %324 = vsyncadd %s315, %s323
          %s325 = smul.addr %s22, 128
          %s326 = scalar_lea.hbm %s2, %s325
          %s328 = sshll.u32 %s318, 4
          %s329 = int_to_ptr.vmem [resolvable:$true] %s328
          %331 = dma.vmem_to_hbm [thread:$0]  %s329, 128, %s326, %s315
        $region40: #{tpu_custom_call.1} parent=27 // pred_fallthru
          _
      $region28: #{tpu_custom_call.1} parent=5 // pred_fallthru
        _
      %p332 = scmp.le.s32.totalorder 2, %s17
      // Predicated region
      $region41: #{tpu_custom_call.1} parent=5 // pred_check
        %p333 = pneg %p332
      $region42: #{tpu_custom_call.1} parent=5 // pred_check_branch
        %335 = sbr.rel (%p333) target = $region44
      $region43: #{tpu_custom_call.1} parent=5 // pred_region
        %s336 = ssub.s32 %s17, 2
        // Predicated region
        $region45: #{tpu_custom_call.1} parent=43 // pred_check
          %p337 = pneg %p98
        $region46: #{tpu_custom_call.1} parent=43 // pred_check_branch
          %339 = sbr.rel (%p337) target = $region48
        $region47: #{tpu_custom_call.1} parent=43 // pred_region
          %s340 = sand.u32 %s83, 1
          %s341 = scalar_lea.sflag [#allocation4], %s340
          %s342 = sand.u32 %s83, 1
          %s343 = smul.addr %s342, 8
          %s344 = scalar_lea.vmem [#allocation7], %s343
          %345 = dma.done %s341, 128
        $region48: #{tpu_custom_call.1} parent=43 // pred_fallthru
          _
      $region44: #{tpu_custom_call.1} parent=5 // pred_fallthru
        _
    $region6: #{tpu_custom_call.1} parent=1 // loop_footer
      %s21 = sadd.s32 1, %s17
    $region7: #{tpu_custom_call.1} parent=1 // loop_footer_branch
      %16 = sbr.rel target = $region3
    $region8: #{tpu_custom_call.1} parent=1 // loop_exit
      _
    %346 = vsyncpa [#allocation3], 1
    %s347 = scalar_lea.sflag [#allocation3], 1
    %348 = vsyncpa %s347, 1
    %349 = vsyncpa [#allocation6], 1
    %s350 = scalar_lea.sflag [#allocation6], 1
    %351 = vsyncpa %s350, 1
    %352 = vsyncpa [#allocation4], 1
    %s353 = scalar_lea.sflag [#allocation4], 1
    %354 = vsyncpa %s353, 1

</llo_original>
